<compile_context>
chip_gen: v7x
topology: tpu7x:2x2x1
jax: 0.10.0
libtpu: 0.0.40
codegen_flags: <defaults>
</compile_context>

<pallas_src>
import jax
import jax.numpy as jnp
from jax.experimental import pallas as pl
from jax.experimental.pallas import tpu as pltpu


def _round_up(n, m):
    return ((n + m - 1) // m) * m


def _mlp_kernel(x_ref, w1_ref, b1_ref, w2_ref, b2_ref, w3_ref, b3_ref, o_ref):
    # Hidden layer 1: Linear(D, H) + ReLU   (bf16 inputs, f32 accumulation)
    h1 = jnp.dot(x_ref[...], w1_ref[...], preferred_element_type=jnp.float32)
    h1 = jnp.maximum(h1 + b1_ref[...], 0.0)                    # (TB, H)

    # Hidden layer 2: Linear(H, H//2) + ReLU
    h2 = jnp.dot(h1.astype(w2_ref.dtype), w2_ref[...],
                 preferred_element_type=jnp.float32)
    h2 = jnp.maximum(h2 + b2_ref[...], 0.0)                    # (TB, H2)

    # Output layer: Linear(H//2, 1) done on the VPU/XLU (no MXU pass for N=1):
    # w3 is stored as a (1, H2) row -> broadcast multiply + cross-lane reduce.
    out = jnp.sum(h2 * w3_ref[...].astype(jnp.float32), axis=-1, keepdims=True)
    out = out + b3_ref[...]                                    # (TB, 1)

    o_ref[...] = out.astype(o_ref.dtype)


def simple_binary_classifier(x, params, *, block_b=1024):
    """Forward pass of SimpleBinaryClassifier.

    x: (B, input_dim) float32 (cast to bf16 internally)
    params: w1 (D,H) bf16, b1 (1,H) f32, w2 (H,H2) bf16, b2 (1,H2) f32,
            w3 (1,H2) bf16 (row), b3 (1,1) f32
    returns: (B, 1) float32 logits (no sigmoid, matching the PyTorch module)
    """
    w1 = params["w1"].astype(jnp.bfloat16)
    w2 = params["w2"].astype(jnp.bfloat16)
    w3 = params["w3"].astype(jnp.bfloat16)
    b1 = params["b1"].astype(jnp.float32)
    b2 = params["b2"].astype(jnp.float32)
    b3 = params["b3"].astype(jnp.float32)

    B, D = x.shape
    H = w1.shape[1]
    H2 = w2.shape[1]

    x = x.astype(jnp.bfloat16)  # halve the dominant HBM read traffic

    # Pick a batch tile; pad B up to a multiple of it (padded rows sliced off).
    tb = min(block_b, _round_up(B, 8))
    bp = _round_up(B, tb)
    if bp != B:
        x = jnp.pad(x, ((0, bp - B), (0, 0)))
    grid = (bp // tb,)

    # Weights/biases: constant index map -> fetched once, VMEM-resident.
    def const_spec(a):
        return pl.BlockSpec(a.shape, lambda i, _nd=a.ndim: (0,) * _nd)

    flops = 2 * bp * (D * H + H * H2 + H2)
    bytes_accessed = (
        x.size * x.dtype.itemsize
        + (w1.size + w2.size + w3.size) * 2
        + (b1.size + b2.size + b3.size) * 4
        + bp * 4
    )

    out = pl.pallas_call(
        _mlp_kernel,
        out_shape=jax.ShapeDtypeStruct((bp, 1), jnp.float32),
        grid=grid,
        in_specs=[
            pl.BlockSpec((tb, D), lambda i: (i, 0)),
            const_spec(w1), const_spec(b1),
            const_spec(w2), const_spec(b2),
            const_spec(w3), const_spec(b3),
        ],
        out_specs=pl.BlockSpec((tb, 1), lambda i: (i, 0)),
        compiler_params=pltpu.CompilerParams(
            dimension_semantics=("parallel",),
        ),
        cost_estimate=pl.CostEstimate(
            flops=flops, transcendentals=0, bytes_accessed=int(bytes_accessed)),
    )(x, w1, b1, w2, b2, w3, b3)

    return out[:B]


def init_params(key, input_dim, hidden_size):
    """Deterministic init mimicking nn.Linear's U(-1/sqrt(fan_in), 1/sqrt(fan_in)).

    Weights stored (in_features, out_features) in bf16 (w3 as a (1, H2) row);
    biases kept in f32.
    """
    h2 = hidden_size // 2
    keys = jax.random.split(key, 6)

    def lin(kw, kb, fan_in, fan_out):
        bound = 1.0 / jnp.sqrt(float(fan_in))
        w = jax.random.uniform(kw, (fan_in, fan_out), jnp.float32, -bound, bound)
        b = jax.random.uniform(kb, (1, fan_out), jnp.float32, -bound, bound)
        return w.astype(jnp.bfloat16), b

    w1, b1 = lin(keys[0], keys[1], input_dim, hidden_size)
    w2, b2 = lin(keys[2], keys[3], hidden_size, h2)
    w3, b3 = lin(keys[4], keys[5], h2, 1)
    return {"w1": w1, "b1": b1, "w2": w2, "b2": b2,
            "w3": w3.reshape(1, h2), "b3": b3.reshape(1, 1)}


def _reference(x, p):
    """Pure-JAX reference using the same bf16 casts / f32 accumulation."""
    xb = x.astype(jnp.bfloat16)
    h1 = jnp.dot(xb, p["w1"], preferred_element_type=jnp.float32) + p["b1"]
    h1 = jnp.maximum(h1, 0.0)
    h2 = jnp.dot(h1.astype(jnp.bfloat16), p["w2"],
                 preferred_element_type=jnp.float32) + p["b2"]
    h2 = jnp.maximum(h2, 0.0)
    return jnp.sum(h2 * p["w3"].astype(jnp.float32), axis=-1, keepdims=True) + p["b3"]


if __name__ == "__main__":
    key = jax.random.PRNGKey(0)
    k_x, k_p = jax.random.split(key)

    batch, input_dim, hidden_size = 8, 16, 32
    x = jax.random.normal(k_x, (batch, input_dim), dtype=jnp.float32)
    params = init_params(k_p, input_dim, hidden_size)

    out = simple_binary_classifier(x, params)
    out = jax.block_until_ready(out)

    ref = _reference(x, params)
    assert out.shape == (batch, 1)
    assert jnp.allclose(out, ref, atol=1e-3, rtol=1e-3), float(jnp.max(jnp.abs(out - ref)))

    print("KERNEL_OK")
</pallas_src>

<mosaic_0001>
module attributes {stable_mosaic.version = 11 : i64} {
  func.func @_mlp_kernel(%arg0: i32, %arg1: memref<8x16xbf16, #tpu.memory_space<vmem>>, %arg2: memref<16x32xbf16, #tpu.memory_space<vmem>>, %arg3: memref<1x32xf32, #tpu.memory_space<vmem>>, %arg4: memref<32x16xbf16, #tpu.memory_space<vmem>>, %arg5: memref<1x16xf32, #tpu.memory_space<vmem>>, %arg6: memref<1x16xbf16, #tpu.memory_space<vmem>>, %arg7: memref<1x1xf32, #tpu.memory_space<vmem>>, %arg8: memref<8x1xf32, #tpu.memory_space<vmem>>) attributes {dimension_semantics = [#tpu.dimension_semantics<parallel>], iteration_bounds = array<i64: 1>, scalar_prefetch = 0 : i64, scratch_operands = 0 : i64, tpu.core_type = #tpu.core_type<tc>, window_params = [{transform_indices = @transform_0, window_bounds = array<i64: 8, 16>}, {pipeline_mode = #tpu.pipeline_mode<synchronous>, transform_indices = @transform_1, window_bounds = array<i64: 16, 32>}, {pipeline_mode = #tpu.pipeline_mode<synchronous>, transform_indices = @transform_2, window_bounds = array<i64: 1, 32>}, {pipeline_mode = #tpu.pipeline_mode<synchronous>, transform_indices = @transform_3, window_bounds = array<i64: 32, 16>}, {pipeline_mode = #tpu.pipeline_mode<synchronous>, transform_indices = @transform_4, window_bounds = array<i64: 1, 16>}, {pipeline_mode = #tpu.pipeline_mode<synchronous>, transform_indices = @transform_5, window_bounds = array<i64: 1, 16>}, {pipeline_mode = #tpu.pipeline_mode<synchronous>, transform_indices = @transform_6, window_bounds = array<i64: 1, 1>}, {transform_indices = @transform_7, window_bounds = array<i64: 8, 1>}]} {
    %c0 = arith.constant 0 : index
    %c0_0 = arith.constant 0 : index
    %0 = vector.load %arg1[%c0, %c0_0] : memref<8x16xbf16, #tpu.memory_space<vmem>>, vector<8x16xbf16>
    %c0_1 = arith.constant 0 : index
    %c0_2 = arith.constant 0 : index
    %1 = vector.load %arg2[%c0_1, %c0_2] : memref<16x32xbf16, #tpu.memory_space<vmem>>, vector<16x32xbf16>
    %cst = arith.constant dense<0.000000e+00> : vector<8x32xf32>
    %2 = tpu.matmul %0, %1, %cst {dimension_numbers = #tpu.dot_dimension_numbers<[1], [0], [0], [1], [0, 0, 1, 1], [], []>} : vector<8x16xbf16>, vector<16x32xbf16>, vector<8x32xf32> -> vector<8x32xf32>
    %c0_3 = arith.constant 0 : index
    %c0_4 = arith.constant 0 : index
    %3 = vector.load %arg3[%c0_3, %c0_4] : memref<1x32xf32, #tpu.memory_space<vmem>>, vector<1x32xf32>
    %4 = vector.broadcast %3 : vector<1x32xf32> to vector<8x32xf32>
    %5 = arith.addf %2, %4 : vector<8x32xf32>
    %cst_5 = arith.constant 0.000000e+00 : f32
    %6 = vector.broadcast %cst_5 : f32 to vector<8x32xf32>
    %7 = arith.maximumf %5, %6 : vector<8x32xf32>
    %8 = arith.truncf %7 : vector<8x32xf32> to vector<8x32xbf16>
    %c0_6 = arith.constant 0 : index
    %c0_7 = arith.constant 0 : index
    %9 = vector.load %arg4[%c0_6, %c0_7] : memref<32x16xbf16, #tpu.memory_space<vmem>>, vector<32x16xbf16>
    %cst_8 = arith.constant dense<0.000000e+00> : vector<8x16xf32>
    %10 = tpu.matmul %8, %9, %cst_8 {dimension_numbers = #tpu.dot_dimension_numbers<[1], [0], [0], [1], [0, 0, 1, 1], [], []>} : vector<8x32xbf16>, vector<32x16xbf16>, vector<8x16xf32> -> vector<8x16xf32>
    %c0_9 = arith.constant 0 : index
    %c0_10 = arith.constant 0 : index
    %11 = vector.load %arg5[%c0_9, %c0_10] : memref<1x16xf32, #tpu.memory_space<vmem>>, vector<1x16xf32>
    %12 = vector.broadcast %11 : vector<1x16xf32> to vector<8x16xf32>
    %13 = arith.addf %10, %12 : vector<8x16xf32>
    %cst_11 = arith.constant 0.000000e+00 : f32
    %14 = vector.broadcast %cst_11 : f32 to vector<8x16xf32>
    %15 = arith.maximumf %13, %14 : vector<8x16xf32>
    %c0_12 = arith.constant 0 : index
    %c0_13 = arith.constant 0 : index
    %16 = vector.load %arg6[%c0_12, %c0_13] : memref<1x16xbf16, #tpu.memory_space<vmem>>, vector<1x16xbf16>
    %17 = arith.extf %16 : vector<1x16xbf16> to vector<1x16xf32>
    %18 = vector.broadcast %17 : vector<1x16xf32> to vector<8x16xf32>
    %19 = arith.mulf %15, %18 : vector<8x16xf32>
    %cst_14 = arith.constant dense<0.000000e+00> : vector<8xf32>
    %20 = vector.multi_reduction <add>, %19, %cst_14 [1] : vector<8x16xf32> to vector<8xf32>
    %21 = vector.shape_cast %20 : vector<8xf32> to vector<8x1xf32>
    %c0_15 = arith.constant 0 : index
    %c0_16 = arith.constant 0 : index
    %22 = vector.load %arg7[%c0_15, %c0_16] : memref<1x1xf32, #tpu.memory_space<vmem>>, vector<1x1xf32>
    %23 = vector.broadcast %22 : vector<1x1xf32> to vector<8x1xf32>
    %24 = arith.addf %21, %23 : vector<8x1xf32>
    %c0_17 = arith.constant 0 : index
    %c0_18 = arith.constant 0 : index
    %25 = vector.load %arg8[%c0_17, %c0_18] : memref<8x1xf32, #tpu.memory_space<vmem>>, vector<8x1xf32>
    tpu.vector_store %arg8[%c0_17, %c0_18], %24 {strides = array<i32>} : memref<8x1xf32, #tpu.memory_space<vmem>>, vector<8x1xf32>,
    return
  }
  func.func @transform_0(%arg0: i32) -> (i32, i32) {
    %c0_i32 = arith.constant 0 : i32
    %c0_i32_0 = arith.constant 0 : i32
    return %arg0, %c0_i32 : i32, i32
  }
  func.func @transform_1(%arg0: i32) -> (i32, i32) {
    %c0_i32 = arith.constant 0 : i32
    %c0_i32_0 = arith.constant 0 : i32
    %c0_i32_1 = arith.constant 0 : i32
    return %c0_i32, %c0_i32_0 : i32, i32
  }
  func.func @transform_2(%arg0: i32) -> (i32, i32) {
    %c0_i32 = arith.constant 0 : i32
    %c0_i32_0 = arith.constant 0 : i32
    %c0_i32_1 = arith.constant 0 : i32
    return %c0_i32, %c0_i32_0 : i32, i32
  }
  func.func @transform_3(%arg0: i32) -> (i32, i32) {
    %c0_i32 = arith.constant 0 : i32
    %c0_i32_0 = arith.constant 0 : i32
    %c0_i32_1 = arith.constant 0 : i32
    return %c0_i32, %c0_i32_0 : i32, i32
  }
  func.func @transform_4(%arg0: i32) -> (i32, i32) {
    %c0_i32 = arith.constant 0 : i32
    %c0_i32_0 = arith.constant 0 : i32
    %c0_i32_1 = arith.constant 0 : i32
    return %c0_i32, %c0_i32_0 : i32, i32
  }
  func.func @transform_5(%arg0: i32) -> (i32, i32) {
    %c0_i32 = arith.constant 0 : i32
    %c0_i32_0 = arith.constant 0 : i32
    %c0_i32_1 = arith.constant 0 : i32
    return %c0_i32, %c0_i32_0 : i32, i32
  }
  func.func @transform_6(%arg0: i32) -> (i32, i32) {
    %c0_i32 = arith.constant 0 : i32
    %c0_i32_0 = arith.constant 0 : i32
    %c0_i32_1 = arith.constant 0 : i32
    return %c0_i32, %c0_i32_0 : i32, i32
  }
  func.func @transform_7(%arg0: i32) -> (i32, i32) {
    %c0_i32 = arith.constant 0 : i32
    %c0_i32_0 = arith.constant 0 : i32
    return %arg0, %c0_i32 : i32, i32
  }
}

</mosaic_0001>

<llo_original>
// kernel: tpu_custom_call.1
$region0: #{tpu_custom_call.1}
  #allocation0 [shape = 'u32[]', space=smem, size = 0x4, offset = 0x4, fixed_abs, tag = 'smem constant byte address 0x4 - core index']
  #allocation1 [shape = 'u32[144,128]{1,0:T(1,128)}', space=vmem, size = 0x12000, scoped, tag = 'internal scratch']
  #allocation2 [shape = 'f32[1,1]{1,0:T(1,128)S(1)}', space=vmem, size = 0x200, scoped, tag = 'scoped memory for tpu_custom_call.1']
  %s0 = inlined_call_operand.vmem [shape: bf16[8,16], index: 0, kind: input, shape index: {}]
  %s1 = inlined_call_operand.vmem [shape: bf16[16,32], index: 1, kind: input, shape index: {}]
  %s2 = inlined_call_operand.vmem [shape: f32[1,32], index: 2, kind: input, shape index: {}]
  %s3 = inlined_call_operand.vmem [shape: bf16[32,16], index: 3, kind: input, shape index: {}]
  %s4 = inlined_call_operand.vmem [shape: f32[1,16], index: 4, kind: input, shape index: {}]
  %s5 = inlined_call_operand.vmem [shape: bf16[1,16], index: 5, kind: input, shape index: {}]
  %s6 = inlined_call_operand.<no memory space> [shape: f32[1,1], index: 6, kind: input, shape index: {}]
  %s7 = inlined_call_operand.vmem [shape: f32[8,1], index: 7, kind: output, shape index: {}]
  %s8 = sld [smem:[#allocation0]]
  $region38: #{tpu_custom_call.1} parent=0
    _
  %s10 = ssub.s32 1, %s8
  %s11 = scalar_select 0, %s10, %s8
  %v12 = vstv %s6
  %13 = vst [vmem:[#allocation2] sm:$0x1] %v12
  // Predicated region
  $region2: #{tpu_custom_call.1} parent=0 // pred_check
    _
  $region3: #{tpu_custom_call.1} parent=0 // pred_check_branch
    %15 = sbr.rel (0) target = $region5
  $region4: #{tpu_custom_call.1} parent=0 // pred_region
    _
  $region5: #{tpu_custom_call.1} parent=0 // pred_fallthru
    _
  // Predicated region
  $region6: #{tpu_custom_call.1} parent=0 // pred_check
    _
  $region7: #{tpu_custom_call.1} parent=0 // pred_check_branch
    %17 = sbr.rel (0) target = $region9
  $region8: #{tpu_custom_call.1} parent=0 // pred_region
    _
  $region9: #{tpu_custom_call.1} parent=0 // pred_fallthru
    _
  // Predicated region
  $region10: #{tpu_custom_call.1} parent=0 // pred_check
    _
  $region11: #{tpu_custom_call.1} parent=0 // pred_check_branch
    %19 = sbr.rel (0) target = $region13
  $region12: #{tpu_custom_call.1} parent=0 // pred_region
    _
  $region13: #{tpu_custom_call.1} parent=0 // pred_fallthru
    _
  // Predicated region
  $region14: #{tpu_custom_call.1} parent=0 // pred_check
    _
  $region15: #{tpu_custom_call.1} parent=0 // pred_check_branch
    %21 = sbr.rel (0) target = $region17
  $region16: #{tpu_custom_call.1} parent=0 // pred_region
    _
  $region17: #{tpu_custom_call.1} parent=0 // pred_fallthru
    _
  // Predicated region
  $region18: #{tpu_custom_call.1} parent=0 // pred_check
    _
  $region19: #{tpu_custom_call.1} parent=0 // pred_check_branch
    %23 = sbr.rel (0) target = $region21
  $region20: #{tpu_custom_call.1} parent=0 // pred_region
    _
  $region21: #{tpu_custom_call.1} parent=0 // pred_fallthru
    _
  // Predicated region
  $region22: #{tpu_custom_call.1} parent=0 // pred_check
    _
  $region23: #{tpu_custom_call.1} parent=0 // pred_check_branch
    %25 = sbr.rel (0) target = $region25
  $region24: #{tpu_custom_call.1} parent=0 // pred_region
    _
  $region25: #{tpu_custom_call.1} parent=0 // pred_fallthru
    _
  // Predicated region
  $region26: #{tpu_custom_call.1} parent=0 // pred_check
    _
  $region27: #{tpu_custom_call.1} parent=0 // pred_check_branch
    %27 = sbr.rel (0) target = $region29
  $region28: #{tpu_custom_call.1} parent=0 // pred_region
    _
  $region29: #{tpu_custom_call.1} parent=0 // pred_fallthru
    _
  %v29 = vld [vmem:[%s0] sm:$0xf]
  %v30 = vld [vmem:[%s1] sm:$0xf]
  %v31 = vld [vmem:[%s1 + $0x4] sm:$0xf]
  %v32 = vld [vmem:[%s2] sm:$0x1]
  %v34 = vlaneseq
  %v35 = vshrl.u32 %v34, 7
  %v36 = vsub.s32 0, %v35
  %v37 = vrot.slane %v32, %v36
  %v41 = vunpack.c.l.b16 %v30
  %v42 = vunpack.c.l.b16 %v31
  %v43 = vpack.c.b16 %v42, %v41
  %vm45 = vcmask 130048
  %v47 = vsel %vm45, %v29, 0
  %49 = vmatprep.subr.bf16.mxu0 0
  %50 = vmatpush1.bf16.msra.mxu0 %v43
  %51 = vmatprep.subr.bf16.mxu0 0
  %52 = vmatpush1.bf16.msra.mxu0 0
  %53 = vmatprep.subr.bf16.mxu0 0
  %54 = vmatpush1.bf16.msra.mxu0 0
  %55 = vmatprep.subr.bf16.mxu0 0
  %56 = vmatpush1.bf16.msra.mxu0 0
  %57 = vmatprep.subr.bf16.mxu0 0
  %58 = vmatpush1.bf16.msra.mxu0 0
  %59 = vmatprep.subr.bf16.mxu0 0
  %60 = vmatpush1.bf16.msra.mxu0 0
  %61 = vmatprep.subr.bf16.mxu0 0
  %62 = vmatpush1.bf16.msra.mxu0 0
  %63 = vmatprep.subr.bf16.mxu0 0
  %64 = vmatpush1.bf16.msra.mxu0 0
  %65 = vmatprep.subr.bf16.mxu0 0
  %66 = vmatpush1.bf16.msra.mxu0 0
  %67 = vmatprep.subr.bf16.mxu0 0
  %68 = vmatpush1.bf16.msra.mxu0 0
  %69 = vmatprep.subr.bf16.mxu0 0
  %70 = vmatpush1.bf16.msra.mxu0 0
  %71 = vmatprep.subr.bf16.mxu0 0
  %72 = vmatpush1.bf16.msra.mxu0 0
  %73 = vmatprep.subr.bf16.mxu0 0
  %74 = vmatpush1.bf16.msra.mxu0 0
  %75 = vmatprep.subr.bf16.mxu0 0
  %76 = vmatpush1.bf16.msra.mxu0 0
  %77 = vmatprep.subr.bf16.mxu0 0
  %78 = vmatpush1.bf16.msra.mxu0 0
  %79 = vmatprep.subr.bf16.mxu0 0
  %80 = vmatpush1.bf16.msra.mxu0 0
  %81 = vmatprep.mubr.bf16.mxu0 0
  %82 = vmatmul.mubr.bf16.gmra.mrb[0].mxu0 %v47
  %v83 = vpop.f32.mrb[0].mxu0
  %v84 = vadd.f32 %v37, %v83
  %v85 = vpop.f32.mrb[0].mxu0
  %v86 = vpop.f32.mrb[0].mxu0
  %v87 = vpop.f32.mrb[0].mxu0
  %88 = vdwg.mxu0
  %v89 = vmax.f32 %v84, 0.0
  %v90 = vpack.c.bf16 %v89, %v89
  %v91 = vld [vmem:[%s3] sm:$0xf]
  %v92 = vld [vmem:[%s3 + $0x4] sm:$0xf]
  %v93 = vld [vmem:[%s3 + $0x8] sm:$0xf]
  %v94 = vld [vmem:[%s3 + $0xc] sm:$0xf]
  %v95 = vld [vmem:[%s4] sm:$0x1]
  %v97 = vlaneseq
  %v98 = vshrl.u32 %v97, 7
  %v99 = vsub.s32 0, %v98
  %v100 = vrot.slane %v95, %v99
  %v106 = vunpack.c.l.b16 %v91
  %v107 = vunpack.c.l.b16 %v92
  %v108 = vunpack.c.l.b16 %v93
  %v109 = vunpack.c.l.b16 %v94
  %v110 = vpack.c.b16 %v107, %v106
  %v111 = vpack.c.b16 %v109, %v108
  %vm114 = vcmask 261120
  %v116 = vsel %vm114, %v90, 0
  %118 = vmatprep.subr.bf16.mxu0 0
  %119 = vmatpush1.bf16.msra.mxu0 %v110
  %120 = vmatprep.subr.bf16.mxu0 0
  %121 = vmatpush1.bf16.msra.mxu0 %v111
  %122 = vmatprep.subr.bf16.mxu0 0
  %123 = vmatpush1.bf16.msra.mxu0 0
  %124 = vmatprep.subr.bf16.mxu0 0
  %125 = vmatpush1.bf16.msra.mxu0 0
  %126 = vmatprep.subr.bf16.mxu0 0
  %127 = vmatpush1.bf16.msra.mxu0 0
  %128 = vmatprep.subr.bf16.mxu0 0
  %129 = vmatpush1.bf16.msra.mxu0 0
  %130 = vmatprep.subr.bf16.mxu0 0
  %131 = vmatpush1.bf16.msra.mxu0 0
  %132 = vmatprep.subr.bf16.mxu0 0
  %133 = vmatpush1.bf16.msra.mxu0 0
  %134 = vmatprep.subr.bf16.mxu0 0
  %135 = vmatpush1.bf16.msra.mxu0 0
  %136 = vmatprep.subr.bf16.mxu0 0
  %137 = vmatpush1.bf16.msra.mxu0 0
  %138 = vmatprep.subr.bf16.mxu0 0
  %139 = vmatpush1.bf16.msra.mxu0 0
  %140 = vmatprep.subr.bf16.mxu0 0
  %141 = vmatpush1.bf16.msra.mxu0 0
  %142 = vmatprep.subr.bf16.mxu0 0
  %143 = vmatpush1.bf16.msra.mxu0 0
  %144 = vmatprep.subr.bf16.mxu0 0
  %145 = vmatpush1.bf16.msra.mxu0 0
  %146 = vmatprep.subr.bf16.mxu0 0
  %147 = vmatpush1.bf16.msra.mxu0 0
  %148 = vmatprep.subr.bf16.mxu0 0
  %149 = vmatpush1.bf16.msra.mxu0 0
  %150 = vmatprep.mubr.bf16.mxu0 0
  %151 = vmatmul.mubr.bf16.gmra.mrb[0].mxu0 %v116
  %v152 = vpop.f32.mrb[0].mxu0
  %v153 = vadd.f32 %v100, %v152
  %v154 = vpop.f32.mrb[0].mxu0
  %v155 = vpop.f32.mrb[0].mxu0
  %v156 = vpop.f32.mrb[0].mxu0
  %157 = vdwg.mxu0
  %v158 = vmax.f32 %v153, 0.0
  %v159 = vld [vmem:[%s5] sm:$0x1]
  %v160 = vunpack.c.l.bf16 %v159
  %v161 = vlaneseq
  %v162 = vshrl.u32 %v161, 7
  %v163 = vsub.s32 0, %v162
  %v164 = vrot.slane %v160, %v163
  %v165 = vmul.f32 %v158, %v164
  %v166 = vsel %vm45, %v165, 0.0
  %167 = vadd.xlane.f32.xlu0 %v166
  %v168 = vpop.xlane.xlu0 %167
  %v169 = vld [vmem:[#allocation2] sm:$0x1]
  %v171 = vlaneseq
  %v172 = vshrl.u32 %v171, 7
  %v173 = vsub.s32 0, %v172
  %v174 = vrot.slane %v169, %v173
  %v176 = vadd.f32 %v168, %v174
  %vm177 = vcmask 7168
  %178 = vst.msk [vmem:[%s7] sm:$0xff] %vm177, %v176
  // Predicated region
  $region30: #{tpu_custom_call.1} parent=0 // pred_check
    _
  $region31: #{tpu_custom_call.1} parent=0 // pred_check_branch
    %180 = sbr.rel (0) target = $region33
  $region32: #{tpu_custom_call.1} parent=0 // pred_region
    _
  $region33: #{tpu_custom_call.1} parent=0 // pred_fallthru
    _
  // Predicated region
  $region34: #{tpu_custom_call.1} parent=0 // pred_check
    _
  $region35: #{tpu_custom_call.1} parent=0 // pred_check_branch
    %182 = sbr.rel (0) target = $region37
  $region36: #{tpu_custom_call.1} parent=0 // pred_region
    _
  $region37: #{tpu_custom_call.1} parent=0 // pred_fallthru
    _

</llo_original>
